<compile_context>
chip_gen: v7x
topology: tpu7x:2x2x1
jax: 0.10.0
libtpu: 0.0.40
codegen_flags: <defaults>
</compile_context>

<pallas_src>
import functools

import jax
import jax.numpy as jnp
from jax.experimental import pallas as pl
from jax.experimental.pallas import tpu as pltpu


def _round_up(x, m):
    return -(-x // m) * m


def _cosine_loss_kernel(x_ref, t_ref, o_ref, *, n_rows, tile_n):
    # x_ref: (tile_n, C) native dtype, t_ref: (tile_n, 1) int32,
    # o_ref: (1, 8, 128) f32 — this tile's own partial-sum block (no revisits).
    i = pl.program_id(0)

    x = x_ref[...].astype(jnp.float32)   # cast after DMA (keeps HBM traffic narrow for bf16)
    t = t_ref[...]                       # (tile_n, 1) int32 class ids

    # probs = <x, onehot(t)> * rsqrt(||x||^2): no (N,C) divide, rsqrt on EUP slot.
    # Keep the squaring in f32 (post-cast) to preserve sumsq precision for bf16 inputs.
    sumsq = jnp.sum(x * x, axis=1, keepdims=True)                        # (tile_n, 1)
    col_ids = jax.lax.broadcasted_iota(jnp.int32, (1, x.shape[1]), 1)    # (1, C) broadcast
    gathered = jnp.sum(jnp.where(col_ids == t, x, 0.0), axis=1, keepdims=True)
    # eps only affects all-zero rows (which are 0/0 NaN in the reference module).
    probs = gathered * jax.lax.rsqrt(sumsq + 1e-12)                      # (tile_n, 1)

    # Mask rows past the logical batch (padded last tile reads undefined data).
    row_ids = i * tile_n + jax.lax.broadcasted_iota(jnp.int32, probs.shape, 0)
    probs = jnp.where(row_ids < n_rows, probs, 0.0)

    # Per-tile partial sum -> lane/sublane-aligned output block; grid axis stays parallel.
    partial = jnp.sum(probs)
    o_ref[...] = jnp.broadcast_to(partial, o_ref.shape).astype(jnp.float32)


def cosine_loss(inputs, targets, size_average=True,
                target_tile_bytes=4 * 1024 * 1024,
                vmem_budget_bytes=12 * 1024 * 1024):
    """inputs: (N, C) float (any float dtype), targets: (N,) int class ids -> scalar loss."""
    N, C = inputs.shape
    itemsize = jnp.dtype(inputs.dtype).itemsize

    # Sublane granularity: 8 rows for 4-byte, 16 for 2-byte, 32 for 1-byte dtypes.
    sub = max(8, 32 // itemsize)

    # Byte-budget tile sizing:
    #   * aim for ~target_tile_bytes of input per grid step (amortizes ~0.35us/step),
    #   * cap so 2x double-buffered input + ~2x f32 working copies fit scoped VMEM
    #     on every generation (v5e 16 MiB default, v7x 32 MiB default).
    rows_target = max(1, target_tile_bytes // (C * itemsize))
    rows_cap = max(1, vmem_budget_bytes // (C * (2 * itemsize + 8)))
    rows_batch = (N // sub) * sub if N >= sub else sub    # keep blocks within the array
    tile_n = min(rows_target, rows_cap, rows_batch)
    tile_n = max(sub, (tile_n // sub) * sub)

    grid = (pl.cdiv(N, tile_n),)
    num_tiles = grid[0]

    t2d = targets.reshape(N, 1).astype(jnp.int32)
    kernel = functools.partial(_cosine_loss_kernel, n_rows=N, tile_n=tile_n)

    partials = pl.pallas_call(
        kernel,
        out_shape=jax.ShapeDtypeStruct((num_tiles, 8, 128), jnp.float32),
        grid=grid,
        in_specs=[
            pl.BlockSpec((tile_n, C), lambda i: (i, 0)),   # native dtype, cast in-kernel
            pl.BlockSpec((tile_n, 1), lambda i: (i, 0)),
        ],
        out_specs=pl.BlockSpec((1, 8, 128), lambda i: (i, 0, 0)),
        compiler_params=pltpu.CompilerParams(
            dimension_semantics=("parallel",)),            # independent tiles -> megacore
        cost_estimate=pl.CostEstimate(
            flops=4 * N * C,
            transcendentals=N,
            bytes_accessed=N * C * itemsize + N * 4 + num_tiles * 8 * 128 * 4),
    )(inputs, t2d)

    # sum over valid rows of (1 - p) == N - sum(p); padded rows contribute exactly 0.
    loss_sum = jnp.float32(N) - jnp.sum(partials[:, 0, 0])
    return loss_sum / N if size_average else loss_sum


if __name__ == "__main__":
    key = jax.random.PRNGKey(0)
    kx, kt = jax.random.split(key)

    N, C = 8, 32  # small batch of 8 samples, 32 classes
    x = jax.random.normal(kx, (N, C), dtype=jnp.float32)
    targets = jax.random.randint(kt, (N,), 0, C, dtype=jnp.int32)

    loss = cosine_loss(x, targets, size_average=True)
    jax.block_until_ready(loss)

    # sanity check against a plain-JAX reference of the PyTorch forward
    p_ref = x / jnp.linalg.norm(x, axis=1, keepdims=True)
    probs_ref = p_ref[jnp.arange(N), targets]
    ref_mean = jnp.mean(1.0 - probs_ref)
    assert jnp.allclose(loss, ref_mean, rtol=1e-5, atol=1e-5)

    # size_average=False (sum reduction)
    loss_sum = cosine_loss(x, targets, size_average=False)
    jax.block_until_ready(loss_sum)
    assert jnp.allclose(loss_sum, jnp.sum(1.0 - probs_ref), rtol=1e-5, atol=1e-5)

    # ragged batch: exercises the padded last tile + row mask
    N2 = 13
    x2 = jax.random.normal(kx, (N2, C), dtype=jnp.float32)
    t2 = jax.random.randint(kt, (N2,), 0, C, dtype=jnp.int32)
    loss2 = cosine_loss(x2, t2, size_average=True)
    jax.block_until_ready(loss2)
    p2 = x2 / jnp.linalg.norm(x2, axis=1, keepdims=True)
    ref2 = jnp.mean(1.0 - p2[jnp.arange(N2), t2])
    assert jnp.allclose(loss2, ref2, rtol=1e-5, atol=1e-5)

    print("KERNEL_OK")
</pallas_src>

<mosaic_0001>
module attributes {stable_mosaic.version = 11 : i64} {
  func.func @_cosine_loss_kernel(%arg0: i32, %arg1: memref<8x32xf32, #tpu.memory_space<vmem>>, %arg2: memref<8x1xi32, #tpu.memory_space<vmem>>, %arg3: memref<1x8x128xf32, #tpu.memory_space<vmem>>) attributes {dimension_semantics = [#tpu.dimension_semantics<parallel>], iteration_bounds = array<i64: 1>, scalar_prefetch = 0 : i64, scratch_operands = 0 : i64, tpu.core_type = #tpu.core_type<tc>, window_params = [{transform_indices = @transform_0, window_bounds = array<i64: 8, 32>}, {transform_indices = @transform_1, window_bounds = array<i64: 8, 1>}, {transform_indices = @transform_2, window_bounds = array<i64: 1, 8, 128>}]} {
    %c0 = arith.constant 0 : index
    %c0_0 = arith.constant 0 : index
    %0 = vector.load %arg1[%c0, %c0_0] : memref<8x32xf32, #tpu.memory_space<vmem>>, vector<8x32xf32>
    %c0_1 = arith.constant 0 : index
    %c0_2 = arith.constant 0 : index
    %1 = vector.load %arg2[%c0_1, %c0_2] : memref<8x1xi32, #tpu.memory_space<vmem>>, vector<8x1xi32>
    %2 = arith.mulf %0, %0 : vector<8x32xf32>
    %cst = arith.constant dense<0.000000e+00> : vector<8xf32>
    %3 = vector.multi_reduction <add>, %2, %cst [1] : vector<8x32xf32> to vector<8xf32>
    %4 = vector.shape_cast %3 : vector<8xf32> to vector<8x1xf32>
    %5 = tpu.iota {dimensions = array<i32: 1>} : vector<1x32xi32>
    %6 = vector.broadcast %5 : vector<1x32xi32> to vector<8x32xi32>
    %7 = vector.broadcast %1 : vector<8x1xi32> to vector<8x32xi32>
    %8 = arith.cmpi eq, %6, %7 : vector<8x32xi32>
    %cst_3 = arith.constant 0.000000e+00 : f32
    %9 = vector.broadcast %cst_3 : f32 to vector<8x32xf32>
    %10 = arith.select %8, %0, %9 : vector<8x32xi1>, vector<8x32xf32>
    %cst_4 = arith.constant dense<0.000000e+00> : vector<8xf32>
    %11 = vector.multi_reduction <add>, %10, %cst_4 [1] : vector<8x32xf32> to vector<8xf32>
    %12 = vector.shape_cast %11 : vector<8xf32> to vector<8x1xf32>
    %cst_5 = arith.constant 9.99999996E-13 : f32
    %13 = vector.broadcast %cst_5 : f32 to vector<8x1xf32>
    %14 = arith.addf %4, %13 : vector<8x1xf32>
    %15 = math.rsqrt %14 : vector<8x1xf32>
    %16 = arith.mulf %12, %15 : vector<8x1xf32>
    %c8_i32 = arith.constant 8 : i32
    %17 = arith.muli %arg0, %c8_i32 : i32
    %18 = tpu.iota {dimensions = array<i32: 0>} : vector<8x1xi32>
    %19 = vector.broadcast %17 : i32 to vector<8x1xi32>
    %20 = arith.addi %19, %18 : vector<8x1xi32>
    %c8_i32_6 = arith.constant 8 : i32
    %21 = vector.broadcast %c8_i32_6 : i32 to vector<8x1xi32>
    %22 = arith.cmpi slt, %20, %21 : vector<8x1xi32>
    %cst_7 = arith.constant 0.000000e+00 : f32
    %23 = vector.broadcast %cst_7 : f32 to vector<8x1xf32>
    %24 = arith.select %22, %16, %23 : vector<8x1xi1>, vector<8x1xf32>
    %25 = vector.shape_cast %24 : vector<8x1xf32> to vector<1x8x1xf32>
    %cst_8 = arith.constant dense<0.000000e+00> : vector<1xf32>
    %26 = vector.multi_reduction <add>, %25, %cst_8 [1, 2] : vector<1x8x1xf32> to vector<1xf32>
    %27 = vector.shape_cast %26 : vector<1xf32> to vector<1x1x1xf32>
    %28 = vector.extract %27[0, 0, 0] : f32 from vector<1x1x1xf32>
    %29 = vector.broadcast %28 : f32 to vector<1x8x128xf32>
    %c0_9 = arith.constant 0 : index
    %c0_10 = arith.constant 0 : index
    %c0_11 = arith.constant 0 : index
    %30 = vector.load %arg3[%c0_9, %c0_10, %c0_11] : memref<1x8x128xf32, #tpu.memory_space<vmem>>, vector<1x8x128xf32>
    tpu.vector_store %arg3[%c0_9, %c0_10, %c0_11], %29 {strides = array<i32>} : memref<1x8x128xf32, #tpu.memory_space<vmem>>, vector<1x8x128xf32>,
    return
  }
  func.func @transform_0(%arg0: i32) -> (i32, i32) {
    %c0_i32 = arith.constant 0 : i32
    %c0_i32_0 = arith.constant 0 : i32
    return %arg0, %c0_i32 : i32, i32
  }
  func.func @transform_1(%arg0: i32) -> (i32, i32) {
    %c0_i32 = arith.constant 0 : i32
    %c0_i32_0 = arith.constant 0 : i32
    return %arg0, %c0_i32 : i32, i32
  }
  func.func @transform_2(%arg0: i32) -> (i32, i32, i32) {
    %c0_i32 = arith.constant 0 : i32
    %c0_i32_0 = arith.constant 0 : i32
    %c0_i32_1 = arith.constant 0 : i32
    return %arg0, %c0_i32, %c0_i32_0 : i32, i32, i32
  }
}

</mosaic_0001>

<llo_original>
// kernel: tpu_custom_call.1
$region0: #{tpu_custom_call.1}
  #allocation0 [shape = 'u32[]', space=smem, size = 0x4, offset = 0x4, fixed_abs, tag = 'smem constant byte address 0x4 - core index']
  #allocation1 [shape = 'u32[144,128]{1,0:T(1,128)}', space=vmem, size = 0x12000, scoped, tag = 'internal scratch']
  %s0 = inlined_call_operand.vmem [shape: f32[8,32], index: 0, kind: input, shape index: {}]
  %s1 = inlined_call_operand.vmem [shape: s32[8,1], index: 1, kind: input, shape index: {}]
  %s2 = inlined_call_operand.hbm [shape: f32[1,8,128], index: 2, kind: output, shape index: {}]
  %s3 = sld [smem:[#allocation0]]
  $region18: #{tpu_custom_call.1} parent=0
    _
  %s5 = ssub.s32 1, %s3
  %s6 = scalar_select 0, %s5, %s3
  $region1: #{tpu_custom_call.1} parent=0
    #allocation2 [shape = 'u8[4096]{0}', space=vmem, size = 0x1000, scoped, tag = 'output window, operand 0, single buffered']
    #allocation3 [shape = 's32[1]{0}', space=sflag, size = 0x4, scoped, tag = 'scoped memory for tpu_custom_call.1']
    %7 = vsyncpa [#allocation3], 0
    // Predicated region
    $region2: #{tpu_custom_call.1} parent=1 // pred_check
      _
    $region3: #{tpu_custom_call.1} parent=1 // pred_check_branch
      %9 = sbr.rel (0) target = $region5
    $region4: #{tpu_custom_call.1} parent=1 // pred_region
      _
    $region5: #{tpu_custom_call.1} parent=1 // pred_fallthru
      _
    // Predicated region
    $region6: #{tpu_custom_call.1} parent=1 // pred_check
      _
    $region7: #{tpu_custom_call.1} parent=1 // pred_check_branch
      %11 = sbr.rel (0) target = $region9
    $region8: #{tpu_custom_call.1} parent=1 // pred_region
      _
    $region9: #{tpu_custom_call.1} parent=1 // pred_fallthru
      _
    %v12 = vld [vmem:[%s0] sm:$0xff]
    %v13 = vld [vmem:[%s1] sm:$0xff]
    %v14 = vmul.f32 %v12, %v12
    %vm15 = vcmask 261120
    %v16 = vsel %vm15, %v14, 0.0
    %17 = vadd.xlane.f32.xlu0 %v16
    %v18 = vpop.xlane.xlu0 %17
    %v19 = vlaneseq
    %v20 = vand.u32 %v19, 127
    %21 = vset.pattern.permute.xlu0 0
    %22 = vperm.xlu0 %21, %v13
    %v23 = vpop.permute.xlu0 %22
    %vm24 = vcmp.eq.s32.totalorder %v20, %v23
    %v25 = vsel %vm24, %v12, 0.0
    %v26 = vsel %vm15, %v25, 0.0
    %27 = vadd.xlane.f32.xlu0 %v26
    %v28 = vpop.xlane.xlu0 %27
    %v29 = vadd.f32 %v18, 1e-12
    %v30 = vrsqrt.pop %v29
    %v31 = vmul.f32 %v28, %v30
    %s32 = smul.u32 0, 8
    %v33 = vlaneseq
    %v34 = vshrl.u32 %v33, 7
    %v35 = vstv %s32
    %v36 = vadd.s32 %v35, %v34
    %vm37 = vcmp.lt.s32.totalorder %v36, 8
    %v38 = vsel %vm37, %v31, 0.0
    %vm39 = vcmask 7168
    %v40 = vsel %vm39, %v38, 0.0
    %41 = vadd.xlane.f32.xlu0 %v40
    %v42 = vpop.xlane.xlu0 %41
    %v43 = vrot.slane %v42, 4
    %v44 = vadd.f32 %v42, %v43
    %v45 = vrot.slane %v44, 2
    %v46 = vadd.f32 %v44, %v45
    %v47 = vrot.slane %v46, 1
    %v48 = vadd.f32 %v46, %v47
    %s49 = vtos %v48
    %v50 = vstv %s49
    %51 = vst [vmem:[#allocation2] sm:$0xff] %v50
    // Predicated region
    $region10: #{tpu_custom_call.1} parent=1 // pred_check
      _
    $region11: #{tpu_custom_call.1} parent=1 // pred_check_branch
      %53 = sbr.rel (0) target = $region13
    $region12: #{tpu_custom_call.1} parent=1 // pred_region
      %s55 = ssub.s32 128, 128
      %56 = vsyncadd [#allocation3], %s55
      %s58 = sshll.u32 [#allocation2], 4
      %s59 = int_to_ptr.vmem [resolvable:$true] %s58
      %61 = dma.vmem_to_hbm [thread:$0]  %s59, 128, %s2, [#allocation3]
    $region13: #{tpu_custom_call.1} parent=1 // pred_fallthru
      _
    // Predicated region
    $region14: #{tpu_custom_call.1} parent=1 // pred_check
      _
    $region15: #{tpu_custom_call.1} parent=1 // pred_check_branch
      %63 = sbr.rel (0) target = $region17
    $region16: #{tpu_custom_call.1} parent=1 // pred_region
      %64 = dma.done [#allocation3], 128
    $region17: #{tpu_custom_call.1} parent=1 // pred_fallthru
      _
    %65 = vsyncpa [#allocation3], 1

</llo_original>
